<compile_context>
chip_gen: v7x
topology: tpu7x:2x2x1
jax: 0.10.0
libtpu: 0.0.40
codegen_flags: <defaults>
</compile_context>

<pallas_src>
import math

import jax
import jax.numpy as jnp
from jax.experimental import pallas as pl
from jax.experimental.pallas import tpu as pltpu

LOGP_LANES = 128  # lane-dense log-prob output slab width
_HALF_LOG_2PI = 0.5 * math.log(2.0 * math.pi)


def bayesnet_chain_kernel(
    # activations / noise (tiled over batch)
    x_ref, eps_z_ref, eps_y_ref,
    # link z parameters (resident)
    zw1_ref, zb1_ref, zw2l_ref, zb2l_ref, zw2s_ref, zb2s_ref,
    # link y parameters (resident)
    yw1_ref, yb1_ref, yw2l_ref, yb2l_ref, yw2s_ref, yb2s_ref,
    # outputs
    z_hat_ref, y_hat_ref, logp_ref,
):
    """Fused BayesNet chain x -> z -> y: two Gaussian vertex updates."""
    x = x_ref[...]
    eps_z = eps_z_ref[...]
    eps_y = eps_y_ref[...]

    # ---- vertex z: params = MLP(x); reparam sample; log-prob ----
    h = jnp.dot(x, zw1_ref[...], preferred_element_type=jnp.float32) + zb1_ref[...]
    h = jnp.maximum(h, 0.0)
    loc_z = jnp.dot(h, zw2l_ref[...], preferred_element_type=jnp.float32) + zb2l_ref[...]
    pre_z = jnp.dot(h, zw2s_ref[...], preferred_element_type=jnp.float32) + zb2s_ref[...]
    scale_z = jax.nn.softplus(pre_z) + 1e-6
    z_hat = loc_z + scale_z * eps_z
    z_hat_ref[...] = z_hat
    logp_z = jnp.sum(
        -0.5 * eps_z * eps_z - jnp.log(scale_z) - _HALF_LOG_2PI,
        axis=-1, keepdims=True)                                    # (tb, 1)

    # ---- vertex y: params = MLP(z_hat) (z_hat never leaves VMEM) ----
    h2 = jnp.dot(z_hat, yw1_ref[...], preferred_element_type=jnp.float32) + yb1_ref[...]
    h2 = jnp.maximum(h2, 0.0)
    loc_y = jnp.dot(h2, yw2l_ref[...], preferred_element_type=jnp.float32) + yb2l_ref[...]
    pre_y = jnp.dot(h2, yw2s_ref[...], preferred_element_type=jnp.float32) + yb2s_ref[...]
    scale_y = jax.nn.softplus(pre_y) + 1e-6
    y_hat = loc_y + scale_y * eps_y
    y_hat_ref[...] = y_hat
    logp_y = jnp.sum(
        -0.5 * eps_y * eps_y - jnp.log(scale_y) - _HALF_LOG_2PI,
        axis=-1, keepdims=True)                                    # (tb, 1)

    # ---- lane-dense packed log-prob slab: lane 0 = z, lane 1 = y ----
    lane = jax.lax.broadcasted_iota(jnp.int32, logp_ref.shape, dimension=1)
    logp_ref[...] = jnp.where(lane == 0, logp_z,
                              jnp.where(lane == 1, logp_y, 0.0))


def bayesnet_chain(x, eps_z, eps_y, z_params, y_params, *, max_tile_b=512):
    """Run the fused x -> z -> y chain. Returns (z_hat, y_hat, logp_z, logp_y)."""
    B, x_dim = x.shape
    z_dim = eps_z.shape[-1]
    y_dim = eps_y.shape[-1]

    # Batch tile: whole batch when small; 8-multiple tiles when large.
    if B <= max_tile_b:
        tile_b = B
    else:
        tile_b = max_tile_b
        assert B % tile_b == 0, "batch must divide the tile for this simple path"
    grid = (pl.cdiv(B, tile_b),)

    def act_spec(dim):
        return pl.BlockSpec((tile_b, dim), lambda i: (i, 0))

    def resident_spec(arr):
        shape = arr.shape
        return pl.BlockSpec(shape, lambda i: (0, 0))

    in_specs = (
        [act_spec(x_dim), act_spec(z_dim), act_spec(y_dim)]
        + [resident_spec(p) for p in z_params]
        + [resident_spec(p) for p in y_params]
    )
    out_specs = (
        pl.BlockSpec((tile_b, z_dim), lambda i: (i, 0)),
        pl.BlockSpec((tile_b, y_dim), lambda i: (i, 0)),
        pl.BlockSpec((tile_b, LOGP_LANES), lambda i: (i, 0)),
    )
    out_shape = (
        jax.ShapeDtypeStruct((B, z_dim), jnp.float32),
        jax.ShapeDtypeStruct((B, y_dim), jnp.float32),
        jax.ShapeDtypeStruct((B, LOGP_LANES), jnp.float32),
    )

    z_hat, y_hat, logp_slab = pl.pallas_call(
        bayesnet_chain_kernel,
        out_shape=out_shape,
        grid=grid,
        in_specs=in_specs,
        out_specs=out_specs,
        compiler_params=pltpu.CompilerParams(
            dimension_semantics=("parallel",)),
    )(x, eps_z, eps_y, *z_params, *y_params)

    logp_z = logp_slab[:, 0:1]
    logp_y = logp_slab[:, 1:2]
    return z_hat, y_hat, logp_z, logp_y


def init_link(key, din, hidden, dout):
    """Deterministic init mimicking nn.Linear (uniform +/- 1/sqrt(fan_in)).

    The second layer (hidden -> [loc | pre_scale]) is initialized as a single
    (hidden, 2*dout) matrix, then split into loc / scale halves so the kernel
    never slices lanes at offset dout.
    """
    k1, k2, k3, k4 = jax.random.split(key, 4)
    lim1 = 1.0 / math.sqrt(din)
    lim2 = 1.0 / math.sqrt(hidden)
    w1 = jax.random.uniform(k1, (din, hidden), jnp.float32, -lim1, lim1)
    b1 = jax.random.uniform(k2, (1, hidden), jnp.float32, -lim1, lim1)
    w2 = jax.random.uniform(k3, (hidden, 2 * dout), jnp.float32, -lim2, lim2)
    b2 = jax.random.uniform(k4, (1, 2 * dout), jnp.float32, -lim2, lim2)
    w2_loc, w2_scale = w2[:, :dout], w2[:, dout:]
    b2_loc, b2_scale = b2[:, :dout], b2[:, dout:]
    return (w1, b1, w2_loc, b2_loc, w2_scale, b2_scale)


def bayesnet_forward(inputs, params, noise):
    """Mirror of BayesNet.forward for the concrete graph  x -> z -> y.

    `inputs` holds observed input variables (here 'x').  Fills variables_hat
    and log_proba in topological order, returns (new_prev_state,
    variables_hat, log_proba) -- the PyTorch module returns new_prev_state
    and stores the rest as attributes.
    """
    variables_star = dict(inputs)          # observed values
    variables_hat = {}
    log_proba = {"x": None, "z": None, "y": None}

    z_hat, y_hat, z_logp, y_logp = bayesnet_chain(
        variables_star["x"], noise["z"], noise["y"], params["z"], params["y"])

    variables_hat["z"] = z_hat
    log_proba["z"] = z_logp
    variables_hat["y"] = y_hat
    log_proba["y"] = y_logp

    # No recurrent links in this instantiation -> prev_state is None everywhere.
    new_prev_state = {"x": None, "z": None, "y": None}
    return new_prev_state, variables_hat, log_proba


def _reference_forward(x, params, noise):
    """Pure-JAX reference for correctness checking."""
    def vertex(rep, p, eps):
        w1, b1, w2l, b2l, w2s, b2s = p
        h = jnp.maximum(rep @ w1 + b1, 0.0)
        loc = h @ w2l + b2l
        scale = jax.nn.softplus(h @ w2s + b2s) + 1e-6
        sample = loc + scale * eps
        logp = jnp.sum(-0.5 * eps * eps - jnp.log(scale) - _HALF_LOG_2PI,
                       axis=-1, keepdims=True)
        return sample, logp

    z_hat, z_logp = vertex(x, params["z"], noise["z"])
    y_hat, y_logp = vertex(z_hat, params["y"], noise["y"])
    return z_hat, y_hat, z_logp, y_logp


if __name__ == "__main__":
    B, X_DIM, HIDDEN, Z_DIM, Y_DIM = 8, 32, 32, 16, 16

    key = jax.random.PRNGKey(0)
    k_x, k_ez, k_ey, k_lz, k_ly = jax.random.split(key, 5)

    # Observed input variable 'x'
    x = jax.random.normal(k_x, (B, X_DIM), jnp.float32)

    # Link parameters (deterministic, in-script)
    params = {
        "z": init_link(k_lz, X_DIM, HIDDEN, Z_DIM),
        "y": init_link(k_ly, Z_DIM, HIDDEN, Y_DIM),
    }
    # Reparameterization noise (external, deterministic)
    noise = {
        "z": jax.random.normal(k_ez, (B, Z_DIM), jnp.float32),
        "y": jax.random.normal(k_ey, (B, Y_DIM), jnp.float32),
    }

    prev_state, variables_hat, log_proba = bayesnet_forward({"x": x}, params, noise)
    jax.block_until_ready(variables_hat["y"])
    jax.block_until_ready(log_proba["y"])

    assert variables_hat["z"].shape == (B, Z_DIM)
    assert variables_hat["y"].shape == (B, Y_DIM)
    assert log_proba["z"].shape == (B, 1)
    assert log_proba["y"].shape == (B, 1)
    assert prev_state["z"] is None

    # Correctness vs. pure-JAX reference
    ref_z, ref_y, ref_lz, ref_ly = _reference_forward(x, params, noise)
    import numpy as np
    np.testing.assert_allclose(variables_hat["z"], ref_z, rtol=1e-5, atol=1e-5)
    np.testing.assert_allclose(variables_hat["y"], ref_y, rtol=1e-5, atol=1e-5)
    np.testing.assert_allclose(log_proba["z"], ref_lz, rtol=1e-5, atol=1e-5)
    np.testing.assert_allclose(log_proba["y"], ref_ly, rtol=1e-5, atol=1e-5)

    print("KERNEL_OK")
</pallas_src>

<mosaic_0001>
module attributes {stable_mosaic.version = 11 : i64} {
  func.func @bayesnet_chain_kernel(%arg0: i32, %arg1: memref<8x32xf32, #tpu.memory_space<vmem>>, %arg2: memref<8x16xf32, #tpu.memory_space<vmem>>, %arg3: memref<8x16xf32, #tpu.memory_space<vmem>>, %arg4: memref<32x32xf32, #tpu.memory_space<vmem>>, %arg5: memref<1x32xf32, #tpu.memory_space<vmem>>, %arg6: memref<32x16xf32, #tpu.memory_space<vmem>>, %arg7: memref<1x16xf32, #tpu.memory_space<vmem>>, %arg8: memref<32x16xf32, #tpu.memory_space<vmem>>, %arg9: memref<1x16xf32, #tpu.memory_space<vmem>>, %arg10: memref<16x32xf32, #tpu.memory_space<vmem>>, %arg11: memref<1x32xf32, #tpu.memory_space<vmem>>, %arg12: memref<32x16xf32, #tpu.memory_space<vmem>>, %arg13: memref<1x16xf32, #tpu.memory_space<vmem>>, %arg14: memref<32x16xf32, #tpu.memory_space<vmem>>, %arg15: memref<1x16xf32, #tpu.memory_space<vmem>>, %arg16: memref<8x16xf32, #tpu.memory_space<vmem>>, %arg17: memref<8x16xf32, #tpu.memory_space<vmem>>, %arg18: memref<8x128xf32, #tpu.memory_space<vmem>>) attributes {dimension_semantics = [#tpu.dimension_semantics<parallel>], iteration_bounds = array<i64: 1>, scalar_prefetch = 0 : i64, scratch_operands = 0 : i64, tpu.core_type = #tpu.core_type<tc>, window_params = [{transform_indices = @transform_0, window_bounds = array<i64: 8, 32>}, {transform_indices = @transform_1, window_bounds = array<i64: 8, 16>}, {transform_indices = @transform_2, window_bounds = array<i64: 8, 16>}, {pipeline_mode = #tpu.pipeline_mode<synchronous>, transform_indices = @transform_3, window_bounds = array<i64: 32, 32>}, {pipeline_mode = #tpu.pipeline_mode<synchronous>, transform_indices = @transform_4, window_bounds = array<i64: 1, 32>}, {pipeline_mode = #tpu.pipeline_mode<synchronous>, transform_indices = @transform_5, window_bounds = array<i64: 32, 16>}, {pipeline_mode = #tpu.pipeline_mode<synchronous>, transform_indices = @transform_6, window_bounds = array<i64: 1, 16>}, {pipeline_mode = #tpu.pipeline_mode<synchronous>, transform_indices = @transform_7, window_bounds = array<i64: 32, 16>}, {pipeline_mode = #tpu.pipeline_mode<synchronous>, transform_indices = @transform_8, window_bounds = array<i64: 1, 16>}, {pipeline_mode = #tpu.pipeline_mode<synchronous>, transform_indices = @transform_9, window_bounds = array<i64: 16, 32>}, {pipeline_mode = #tpu.pipeline_mode<synchronous>, transform_indices = @transform_10, window_bounds = array<i64: 1, 32>}, {pipeline_mode = #tpu.pipeline_mode<synchronous>, transform_indices = @transform_11, window_bounds = array<i64: 32, 16>}, {pipeline_mode = #tpu.pipeline_mode<synchronous>, transform_indices = @transform_12, window_bounds = array<i64: 1, 16>}, {pipeline_mode = #tpu.pipeline_mode<synchronous>, transform_indices = @transform_13, window_bounds = array<i64: 32, 16>}, {pipeline_mode = #tpu.pipeline_mode<synchronous>, transform_indices = @transform_14, window_bounds = array<i64: 1, 16>}, {transform_indices = @transform_15, window_bounds = array<i64: 8, 16>}, {transform_indices = @transform_16, window_bounds = array<i64: 8, 16>}, {transform_indices = @transform_17, window_bounds = array<i64: 8, 128>}]} {
    %c0 = arith.constant 0 : index
    %c0_0 = arith.constant 0 : index
    %0 = vector.load %arg1[%c0, %c0_0] : memref<8x32xf32, #tpu.memory_space<vmem>>, vector<8x32xf32>
    %c0_1 = arith.constant 0 : index
    %c0_2 = arith.constant 0 : index
    %1 = vector.load %arg2[%c0_1, %c0_2] : memref<8x16xf32, #tpu.memory_space<vmem>>, vector<8x16xf32>
    %c0_3 = arith.constant 0 : index
    %c0_4 = arith.constant 0 : index
    %2 = vector.load %arg3[%c0_3, %c0_4] : memref<8x16xf32, #tpu.memory_space<vmem>>, vector<8x16xf32>
    %c0_5 = arith.constant 0 : index
    %c0_6 = arith.constant 0 : index
    %3 = vector.load %arg4[%c0_5, %c0_6] : memref<32x32xf32, #tpu.memory_space<vmem>>, vector<32x32xf32>
    %cst = arith.constant dense<0.000000e+00> : vector<8x32xf32>
    %4 = tpu.matmul %0, %3, %cst {dimension_numbers = #tpu.dot_dimension_numbers<[1], [0], [0], [1], [0, 0, 1, 1], [], []>} : vector<8x32xf32>, vector<32x32xf32>, vector<8x32xf32> -> vector<8x32xf32>
    %c0_7 = arith.constant 0 : index
    %c0_8 = arith.constant 0 : index
    %5 = vector.load %arg5[%c0_7, %c0_8] : memref<1x32xf32, #tpu.memory_space<vmem>>, vector<1x32xf32>
    %6 = vector.broadcast %5 : vector<1x32xf32> to vector<8x32xf32>
    %7 = arith.addf %4, %6 : vector<8x32xf32>
    %cst_9 = arith.constant 0.000000e+00 : f32
    %8 = vector.broadcast %cst_9 : f32 to vector<8x32xf32>
    %9 = arith.maximumf %7, %8 : vector<8x32xf32>
    %c0_10 = arith.constant 0 : index
    %c0_11 = arith.constant 0 : index
    %10 = vector.load %arg6[%c0_10, %c0_11] : memref<32x16xf32, #tpu.memory_space<vmem>>, vector<32x16xf32>
    %cst_12 = arith.constant dense<0.000000e+00> : vector<8x16xf32>
    %11 = tpu.matmul %9, %10, %cst_12 {dimension_numbers = #tpu.dot_dimension_numbers<[1], [0], [0], [1], [0, 0, 1, 1], [], []>} : vector<8x32xf32>, vector<32x16xf32>, vector<8x16xf32> -> vector<8x16xf32>
    %c0_13 = arith.constant 0 : index
    %c0_14 = arith.constant 0 : index
    %12 = vector.load %arg7[%c0_13, %c0_14] : memref<1x16xf32, #tpu.memory_space<vmem>>, vector<1x16xf32>
    %13 = vector.broadcast %12 : vector<1x16xf32> to vector<8x16xf32>
    %14 = arith.addf %11, %13 : vector<8x16xf32>
    %c0_15 = arith.constant 0 : index
    %c0_16 = arith.constant 0 : index
    %15 = vector.load %arg8[%c0_15, %c0_16] : memref<32x16xf32, #tpu.memory_space<vmem>>, vector<32x16xf32>
    %cst_17 = arith.constant dense<0.000000e+00> : vector<8x16xf32>
    %16 = tpu.matmul %9, %15, %cst_17 {dimension_numbers = #tpu.dot_dimension_numbers<[1], [0], [0], [1], [0, 0, 1, 1], [], []>} : vector<8x32xf32>, vector<32x16xf32>, vector<8x16xf32> -> vector<8x16xf32>
    %c0_18 = arith.constant 0 : index
    %c0_19 = arith.constant 0 : index
    %17 = vector.load %arg9[%c0_18, %c0_19] : memref<1x16xf32, #tpu.memory_space<vmem>>, vector<1x16xf32>
    %18 = vector.broadcast %17 : vector<1x16xf32> to vector<8x16xf32>
    %19 = arith.addf %16, %18 : vector<8x16xf32>
    %cst_20 = arith.constant 0.000000e+00 : f32
    %20 = vector.broadcast %cst_20 : f32 to vector<8x16xf32>
    %21 = arith.maximumf %19, %20 : vector<8x16xf32>
    %22 = vector.broadcast %cst_20 : f32 to vector<8x16xf32>
    %23 = arith.subf %19, %22 : vector<8x16xf32>
    %24 = arith.cmpf one, %23, %23 : vector<8x16xf32>
    %25 = vector.broadcast %cst_20 : f32 to vector<8x16xf32>
    %26 = arith.addf %19, %25 : vector<8x16xf32>
    %27 = math.absf %23 : vector<8x16xf32>
    %cst_21 = arith.constant 0.000000e+00 : f32
    %28 = vector.broadcast %cst_21 : f32 to vector<8x16xf32>
    %29 = arith.subf %28, %27 : vector<8x16xf32>
    %30 = math.exp %29 : vector<8x16xf32>
    %31 = math.log1p %30 : vector<8x16xf32>
    %32 = arith.addf %21, %31 : vector<8x16xf32>
    %33 = arith.select %24, %26, %32 : vector<8x16xi1>, vector<8x16xf32>
    %cst_22 = arith.constant 9.99999997E-7 : f32
    %34 = vector.broadcast %cst_22 : f32 to vector<8x16xf32>
    %35 = arith.addf %33, %34 : vector<8x16xf32>
    %36 = arith.mulf %35, %1 : vector<8x16xf32>
    %37 = arith.addf %14, %36 : vector<8x16xf32>
    %c0_23 = arith.constant 0 : index
    %c0_24 = arith.constant 0 : index
    %38 = vector.load %arg16[%c0_23, %c0_24] : memref<8x16xf32, #tpu.memory_space<vmem>>, vector<8x16xf32>
    tpu.vector_store %arg16[%c0_23, %c0_24], %37 {strides = array<i32>} : memref<8x16xf32, #tpu.memory_space<vmem>>, vector<8x16xf32>,
    %cst_25 = arith.constant -5.000000e-01 : f32
    %39 = vector.broadcast %cst_25 : f32 to vector<8x16xf32>
    %40 = arith.mulf %39, %1 : vector<8x16xf32>
    %41 = arith.mulf %40, %1 : vector<8x16xf32>
    %42 = math.log %35 : vector<8x16xf32>
    %43 = arith.subf %41, %42 : vector<8x16xf32>
    %cst_26 = arith.constant 0.918938517 : f32
    %44 = vector.broadcast %cst_26 : f32 to vector<8x16xf32>
    %45 = arith.subf %43, %44 : vector<8x16xf32>
    %cst_27 = arith.constant dense<0.000000e+00> : vector<8xf32>
    %46 = vector.multi_reduction <add>, %45, %cst_27 [1] : vector<8x16xf32> to vector<8xf32>
    %47 = vector.shape_cast %46 : vector<8xf32> to vector<8x1xf32>
    %c0_28 = arith.constant 0 : index
    %c0_29 = arith.constant 0 : index
    %48 = vector.load %arg10[%c0_28, %c0_29] : memref<16x32xf32, #tpu.memory_space<vmem>>, vector<16x32xf32>
    %cst_30 = arith.constant dense<0.000000e+00> : vector<8x32xf32>
    %49 = tpu.matmul %37, %48, %cst_30 {dimension_numbers = #tpu.dot_dimension_numbers<[1], [0], [0], [1], [0, 0, 1, 1], [], []>} : vector<8x16xf32>, vector<16x32xf32>, vector<8x32xf32> -> vector<8x32xf32>
    %c0_31 = arith.constant 0 : index
    %c0_32 = arith.constant 0 : index
    %50 = vector.load %arg11[%c0_31, %c0_32] : memref<1x32xf32, #tpu.memory_space<vmem>>, vector<1x32xf32>
    %51 = vector.broadcast %50 : vector<1x32xf32> to vector<8x32xf32>
    %52 = arith.addf %49, %51 : vector<8x32xf32>
    %cst_33 = arith.constant 0.000000e+00 : f32
    %53 = vector.broadcast %cst_33 : f32 to vector<8x32xf32>
    %54 = arith.maximumf %52, %53 : vector<8x32xf32>
    %c0_34 = arith.constant 0 : index
    %c0_35 = arith.constant 0 : index
    %55 = vector.load %arg12[%c0_34, %c0_35] : memref<32x16xf32, #tpu.memory_space<vmem>>, vector<32x16xf32>
    %cst_36 = arith.constant dense<0.000000e+00> : vector<8x16xf32>
    %56 = tpu.matmul %54, %55, %cst_36 {dimension_numbers = #tpu.dot_dimension_numbers<[1], [0], [0], [1], [0, 0, 1, 1], [], []>} : vector<8x32xf32>, vector<32x16xf32>, vector<8x16xf32> -> vector<8x16xf32>
    %c0_37 = arith.constant 0 : index
    %c0_38 = arith.constant 0 : index
    %57 = vector.load %arg13[%c0_37, %c0_38] : memref<1x16xf32, #tpu.memory_space<vmem>>, vector<1x16xf32>
    %58 = vector.broadcast %57 : vector<1x16xf32> to vector<8x16xf32>
    %59 = arith.addf %56, %58 : vector<8x16xf32>
    %c0_39 = arith.constant 0 : index
    %c0_40 = arith.constant 0 : index
    %60 = vector.load %arg14[%c0_39, %c0_40] : memref<32x16xf32, #tpu.memory_space<vmem>>, vector<32x16xf32>
    %cst_41 = arith.constant dense<0.000000e+00> : vector<8x16xf32>
    %61 = tpu.matmul %54, %60, %cst_41 {dimension_numbers = #tpu.dot_dimension_numbers<[1], [0], [0], [1], [0, 0, 1, 1], [], []>} : vector<8x32xf32>, vector<32x16xf32>, vector<8x16xf32> -> vector<8x16xf32>
    %c0_42 = arith.constant 0 : index
    %c0_43 = arith.constant 0 : index
    %62 = vector.load %arg15[%c0_42, %c0_43] : memref<1x16xf32, #tpu.memory_space<vmem>>, vector<1x16xf32>
    %63 = vector.broadcast %62 : vector<1x16xf32> to vector<8x16xf32>
    %64 = arith.addf %61, %63 : vector<8x16xf32>
    %cst_44 = arith.constant 0.000000e+00 : f32
    %65 = vector.broadcast %cst_44 : f32 to vector<8x16xf32>
    %66 = arith.maximumf %64, %65 : vector<8x16xf32>
    %67 = vector.broadcast %cst_44 : f32 to vector<8x16xf32>
    %68 = arith.subf %64, %67 : vector<8x16xf32>
    %69 = arith.cmpf one, %68, %68 : vector<8x16xf32>
    %70 = vector.broadcast %cst_44 : f32 to vector<8x16xf32>
    %71 = arith.addf %64, %70 : vector<8x16xf32>
    %72 = math.absf %68 : vector<8x16xf32>
    %cst_45 = arith.constant 0.000000e+00 : f32
    %73 = vector.broadcast %cst_45 : f32 to vector<8x16xf32>
    %74 = arith.subf %73, %72 : vector<8x16xf32>
    %75 = math.exp %74 : vector<8x16xf32>
    %76 = math.log1p %75 : vector<8x16xf32>
    %77 = arith.addf %66, %76 : vector<8x16xf32>
    %78 = arith.select %69, %71, %77 : vector<8x16xi1>, vector<8x16xf32>
    %cst_46 = arith.constant 9.99999997E-7 : f32
    %79 = vector.broadcast %cst_46 : f32 to vector<8x16xf32>
    %80 = arith.addf %78, %79 : vector<8x16xf32>
    %81 = arith.mulf %80, %2 : vector<8x16xf32>
    %82 = arith.addf %59, %81 : vector<8x16xf32>
    %c0_47 = arith.constant 0 : index
    %c0_48 = arith.constant 0 : index
    %83 = vector.load %arg17[%c0_47, %c0_48] : memref<8x16xf32, #tpu.memory_space<vmem>>, vector<8x16xf32>
    tpu.vector_store %arg17[%c0_47, %c0_48], %82 {strides = array<i32>} : memref<8x16xf32, #tpu.memory_space<vmem>>, vector<8x16xf32>,
    %cst_49 = arith.constant -5.000000e-01 : f32
    %84 = vector.broadcast %cst_49 : f32 to vector<8x16xf32>
    %85 = arith.mulf %84, %2 : vector<8x16xf32>
    %86 = arith.mulf %85, %2 : vector<8x16xf32>
    %87 = math.log %80 : vector<8x16xf32>
    %88 = arith.subf %86, %87 : vector<8x16xf32>
    %cst_50 = arith.constant 0.918938517 : f32
    %89 = vector.broadcast %cst_50 : f32 to vector<8x16xf32>
    %90 = arith.subf %88, %89 : vector<8x16xf32>
    %cst_51 = arith.constant dense<0.000000e+00> : vector<8xf32>
    %91 = vector.multi_reduction <add>, %90, %cst_51 [1] : vector<8x16xf32> to vector<8xf32>
    %92 = vector.shape_cast %91 : vector<8xf32> to vector<8x1xf32>
    %93 = tpu.iota {dimensions = array<i32: 1>} : vector<8x128xi32>
    %c0_i32 = arith.constant 0 : i32
    %94 = vector.broadcast %c0_i32 : i32 to vector<8x128xi32>
    %95 = arith.cmpi eq, %93, %94 : vector<8x128xi32>
    %c1_i32 = arith.constant 1 : i32
    %96 = vector.broadcast %c1_i32 : i32 to vector<8x128xi32>
    %97 = arith.cmpi eq, %93, %96 : vector<8x128xi32>
    %cst_52 = arith.constant 0.000000e+00 : f32
    %98 = vector.shape_cast %92 : vector<8x1xf32> to vector<8x1xf32>
    %99 = vector.broadcast %98 : vector<8x1xf32> to vector<8x128xf32>
    %100 = vector.broadcast %cst_52 : f32 to vector<8x128xf32>
    %101 = arith.select %97, %99, %100 : vector<8x128xi1>, vector<8x128xf32>
    %102 = vector.shape_cast %47 : vector<8x1xf32> to vector<8x1xf32>
    %103 = vector.broadcast %102 : vector<8x1xf32> to vector<8x128xf32>
    %104 = arith.select %95, %103, %101 : vector<8x128xi1>, vector<8x128xf32>
    %c0_53 = arith.constant 0 : index
    %c0_54 = arith.constant 0 : index
    %105 = vector.load %arg18[%c0_53, %c0_54] : memref<8x128xf32, #tpu.memory_space<vmem>>, vector<8x128xf32>
    tpu.vector_store %arg18[%c0_53, %c0_54], %104 {strides = array<i32>} : memref<8x128xf32, #tpu.memory_space<vmem>>, vector<8x128xf32>,
    return
  }
  func.func @transform_0(%arg0: i32) -> (i32, i32) {
    %c0_i32 = arith.constant 0 : i32
    %c0_i32_0 = arith.constant 0 : i32
    return %arg0, %c0_i32 : i32, i32
  }
  func.func @transform_1(%arg0: i32) -> (i32, i32) {
    %c0_i32 = arith.constant 0 : i32
    %c0_i32_0 = arith.constant 0 : i32
    return %arg0, %c0_i32 : i32, i32
  }
  func.func @transform_2(%arg0: i32) -> (i32, i32) {
    %c0_i32 = arith.constant 0 : i32
    %c0_i32_0 = arith.constant 0 : i32
    return %arg0, %c0_i32 : i32, i32
  }
  func.func @transform_3(%arg0: i32) -> (i32, i32) {
    %c0_i32 = arith.constant 0 : i32
    %c0_i32_0 = arith.constant 0 : i32
    %c0_i32_1 = arith.constant 0 : i32
    return %c0_i32, %c0_i32_0 : i32, i32
  }
  func.func @transform_4(%arg0: i32) -> (i32, i32) {
    %c0_i32 = arith.constant 0 : i32
    %c0_i32_0 = arith.constant 0 : i32
    %c0_i32_1 = arith.constant 0 : i32
    return %c0_i32, %c0_i32_0 : i32, i32
  }
  func.func @transform_5(%arg0: i32) -> (i32, i32) {
    %c0_i32 = arith.constant 0 : i32
    %c0_i32_0 = arith.constant 0 : i32
    %c0_i32_1 = arith.constant 0 : i32
    return %c0_i32, %c0_i32_0 : i32, i32
  }
  func.func @transform_6(%arg0: i32) -> (i32, i32) {
    %c0_i32 = arith.constant 0 : i32
    %c0_i32_0 = arith.constant 0 : i32
    %c0_i32_1 = arith.constant 0 : i32
    return %c0_i32, %c0_i32_0 : i32, i32
  }
  func.func @transform_7(%arg0: i32) -> (i32, i32) {
    %c0_i32 = arith.constant 0 : i32
    %c0_i32_0 = arith.constant 0 : i32
    %c0_i32_1 = arith.constant 0 : i32
    return %c0_i32, %c0_i32_0 : i32, i32
  }
  func.func @transform_8(%arg0: i32) -> (i32, i32) {
    %c0_i32 = arith.constant 0 : i32
    %c0_i32_0 = arith.constant 0 : i32
    %c0_i32_1 = arith.constant 0 : i32
    return %c0_i32, %c0_i32_0 : i32, i32
  }
  func.func @transform_9(%arg0: i32) -> (i32, i32) {
    %c0_i32 = arith.constant 0 : i32
    %c0_i32_0 = arith.constant 0 : i32
    %c0_i32_1 = arith.constant 0 : i32
    return %c0_i32, %c0_i32_0 : i32, i32
  }
  func.func @transform_10(%arg0: i32) -> (i32, i32) {
    %c0_i32 = arith.constant 0 : i32
    %c0_i32_0 = arith.constant 0 : i32
    %c0_i32_1 = arith.constant 0 : i32
    return %c0_i32, %c0_i32_0 : i32, i32
  }
  func.func @transform_11(%arg0: i32) -> (i32, i32) {
    %c0_i32 = arith.constant 0 : i32
    %c0_i32_0 = arith.constant 0 : i32
    %c0_i32_1 = arith.constant 0 : i32
    return %c0_i32, %c0_i32_0 : i32, i32
  }
  func.func @transform_12(%arg0: i32) -> (i32, i32) {
    %c0_i32 = arith.constant 0 : i32
    %c0_i32_0 = arith.constant 0 : i32
    %c0_i32_1 = arith.constant 0 : i32
    return %c0_i32, %c0_i32_0 : i32, i32
  }
  func.func @transform_13(%arg0: i32) -> (i32, i32) {
    %c0_i32 = arith.constant 0 : i32
    %c0_i32_0 = arith.constant 0 : i32
    %c0_i32_1 = arith.constant 0 : i32
    return %c0_i32, %c0_i32_0 : i32, i32
  }
  func.func @transform_14(%arg0: i32) -> (i32, i32) {
    %c0_i32 = arith.constant 0 : i32
    %c0_i32_0 = arith.constant 0 : i32
    %c0_i32_1 = arith.constant 0 : i32
    return %c0_i32, %c0_i32_0 : i32, i32
  }
  func.func @transform_15(%arg0: i32) -> (i32, i32) {
    %c0_i32 = arith.constant 0 : i32
    %c0_i32_0 = arith.constant 0 : i32
    return %arg0, %c0_i32 : i32, i32
  }
  func.func @transform_16(%arg0: i32) -> (i32, i32) {
    %c0_i32 = arith.constant 0 : i32
    %c0_i32_0 = arith.constant 0 : i32
    return %arg0, %c0_i32 : i32, i32
  }
  func.func @transform_17(%arg0: i32) -> (i32, i32) {
    %c0_i32 = arith.constant 0 : i32
    %c0_i32_0 = arith.constant 0 : i32
    return %arg0, %c0_i32 : i32, i32
  }
}

</mosaic_0001>

<llo_original>
// kernel: tpu_custom_call.1
$region0: #{tpu_custom_call.1}
  #allocation0 [shape = 'u32[]', space=smem, size = 0x4, offset = 0x4, fixed_abs, tag = 'smem constant byte address 0x4 - core index']
  #allocation1 [shape = 'u32[144,128]{1,0:T(1,128)}', space=vmem, size = 0x12000, scoped, tag = 'internal scratch']
  %s0 = inlined_call_operand.vmem [shape: f32[8,32], index: 0, kind: input, shape index: {}]
  %s1 = inlined_call_operand.vmem [shape: f32[8,16], index: 1, kind: input, shape index: {}]
  %s2 = inlined_call_operand.vmem [shape: f32[8,16], index: 2, kind: input, shape index: {}]
  %s3 = inlined_call_operand.vmem [shape: f32[32,32], index: 3, kind: input, shape index: {}]
  %s4 = inlined_call_operand.vmem [shape: f32[1,32], index: 4, kind: input, shape index: {}]
  %s5 = inlined_call_operand.vmem [shape: f32[32,16], index: 5, kind: input, shape index: {}]
  %s6 = inlined_call_operand.vmem [shape: f32[1,16], index: 6, kind: input, shape index: {}]
  %s7 = inlined_call_operand.vmem [shape: f32[32,16], index: 7, kind: input, shape index: {}]
  %s8 = inlined_call_operand.vmem [shape: f32[1,16], index: 8, kind: input, shape index: {}]
  %s9 = inlined_call_operand.vmem [shape: f32[16,32], index: 9, kind: input, shape index: {}]
  %s10 = inlined_call_operand.vmem [shape: f32[1,32], index: 10, kind: input, shape index: {}]
  %s11 = inlined_call_operand.vmem [shape: f32[32,16], index: 11, kind: input, shape index: {}]
  %s12 = inlined_call_operand.vmem [shape: f32[1,16], index: 12, kind: input, shape index: {}]
  %s13 = inlined_call_operand.vmem [shape: f32[32,16], index: 13, kind: input, shape index: {}]
  %s14 = inlined_call_operand.vmem [shape: f32[1,16], index: 14, kind: input, shape index: {}]
  %s15 = inlined_call_operand.hbm [shape: f32[8,16], index: 15, kind: output, shape index: {0}]
  %s16 = inlined_call_operand.hbm [shape: f32[8,16], index: 16, kind: output, shape index: {1}]
  %s17 = inlined_call_operand.hbm [shape: f32[8,128], index: 17, kind: output, shape index: {2}]
  %18 = xla_tuple %s15, %s16, %s17
  %s19 = sld [smem:[#allocation0]]
  $region86: #{tpu_custom_call.1} parent=0
    _
  %s21 = ssub.s32 1, %s19
  %s22 = scalar_select 0, %s21, %s19
  $region1: #{tpu_custom_call.1} parent=0
    #allocation2 [shape = 'u8[4096]{0}', space=vmem, size = 0x1000, scoped, tag = 'output window, operand 0, single buffered']
    #allocation3 [shape = 's32[1]{0}', space=sflag, size = 0x4, scoped, tag = 'scoped memory for tpu_custom_call.1']
    #allocation4 [shape = 'u8[4096]{0}', space=vmem, size = 0x1000, scoped, tag = 'output window, operand 1, single buffered']
    #allocation5 [shape = 's32[1]{0}', space=sflag, size = 0x4, scoped, tag = 'scoped memory for tpu_custom_call.1']
    #allocation6 [shape = 'u8[4096]{0}', space=vmem, size = 0x1000, scoped, tag = 'output window, operand 2, single buffered']
    %23 = vsyncpa [#allocation3], 0
    %24 = vsyncpa [#allocation5], 0
    // Predicated region
    $region2: #{tpu_custom_call.1} parent=1 // pred_check
      _
    $region3: #{tpu_custom_call.1} parent=1 // pred_check_branch
      %26 = sbr.rel (0) target = $region5
    $region4: #{tpu_custom_call.1} parent=1 // pred_region
      _
    $region5: #{tpu_custom_call.1} parent=1 // pred_fallthru
      _
    // Predicated region
    $region6: #{tpu_custom_call.1} parent=1 // pred_check
      _
    $region7: #{tpu_custom_call.1} parent=1 // pred_check_branch
      %28 = sbr.rel (0) target = $region9
    $region8: #{tpu_custom_call.1} parent=1 // pred_region
      _
    $region9: #{tpu_custom_call.1} parent=1 // pred_fallthru
      _
    // Predicated region
    $region10: #{tpu_custom_call.1} parent=1 // pred_check
      _
    $region11: #{tpu_custom_call.1} parent=1 // pred_check_branch
      %30 = sbr.rel (0) target = $region13
    $region12: #{tpu_custom_call.1} parent=1 // pred_region
      _
    $region13: #{tpu_custom_call.1} parent=1 // pred_fallthru
      _
    // Predicated region
    $region14: #{tpu_custom_call.1} parent=1 // pred_check
      _
    $region15: #{tpu_custom_call.1} parent=1 // pred_check_branch
      %32 = sbr.rel (0) target = $region17
    $region16: #{tpu_custom_call.1} parent=1 // pred_region
      _
    $region17: #{tpu_custom_call.1} parent=1 // pred_fallthru
      _
    // Predicated region
    $region18: #{tpu_custom_call.1} parent=1 // pred_check
      _
    $region19: #{tpu_custom_call.1} parent=1 // pred_check_branch
      %34 = sbr.rel (0) target = $region21
    $region20: #{tpu_custom_call.1} parent=1 // pred_region
      _
    $region21: #{tpu_custom_call.1} parent=1 // pred_fallthru
      _
    // Predicated region
    $region22: #{tpu_custom_call.1} parent=1 // pred_check
      _
    $region23: #{tpu_custom_call.1} parent=1 // pred_check_branch
      %36 = sbr.rel (0) target = $region25
    $region24: #{tpu_custom_call.1} parent=1 // pred_region
      _
    $region25: #{tpu_custom_call.1} parent=1 // pred_fallthru
      _
    // Predicated region
    $region26: #{tpu_custom_call.1} parent=1 // pred_check
      _
    $region27: #{tpu_custom_call.1} parent=1 // pred_check_branch
      %38 = sbr.rel (0) target = $region29
    $region28: #{tpu_custom_call.1} parent=1 // pred_region
      _
    $region29: #{tpu_custom_call.1} parent=1 // pred_fallthru
      _
    // Predicated region
    $region30: #{tpu_custom_call.1} parent=1 // pred_check
      _
    $region31: #{tpu_custom_call.1} parent=1 // pred_check_branch
      %40 = sbr.rel (0) target = $region33
    $region32: #{tpu_custom_call.1} parent=1 // pred_region
      _
    $region33: #{tpu_custom_call.1} parent=1 // pred_fallthru
      _
    // Predicated region
    $region34: #{tpu_custom_call.1} parent=1 // pred_check
      _
    $region35: #{tpu_custom_call.1} parent=1 // pred_check_branch
      %42 = sbr.rel (0) target = $region37
    $region36: #{tpu_custom_call.1} parent=1 // pred_region
      _
    $region37: #{tpu_custom_call.1} parent=1 // pred_fallthru
      _
    // Predicated region
    $region38: #{tpu_custom_call.1} parent=1 // pred_check
      _
    $region39: #{tpu_custom_call.1} parent=1 // pred_check_branch
      %44 = sbr.rel (0) target = $region41
    $region40: #{tpu_custom_call.1} parent=1 // pred_region
      _
    $region41: #{tpu_custom_call.1} parent=1 // pred_fallthru
      _
    // Predicated region
    $region42: #{tpu_custom_call.1} parent=1 // pred_check
      _
    $region43: #{tpu_custom_call.1} parent=1 // pred_check_branch
      %46 = sbr.rel (0) target = $region45
    $region44: #{tpu_custom_call.1} parent=1 // pred_region
      _
    $region45: #{tpu_custom_call.1} parent=1 // pred_fallthru
      _
    // Predicated region
    $region46: #{tpu_custom_call.1} parent=1 // pred_check
      _
    $region47: #{tpu_custom_call.1} parent=1 // pred_check_branch
      %48 = sbr.rel (0) target = $region49
    $region48: #{tpu_custom_call.1} parent=1 // pred_region
      _
    $region49: #{tpu_custom_call.1} parent=1 // pred_fallthru
      _
    // Predicated region
    $region50: #{tpu_custom_call.1} parent=1 // pred_check
      _
    $region51: #{tpu_custom_call.1} parent=1 // pred_check_branch
      %50 = sbr.rel (0) target = $region53
    $region52: #{tpu_custom_call.1} parent=1 // pred_region
      _
    $region53: #{tpu_custom_call.1} parent=1 // pred_fallthru
      _
    // Predicated region
    $region54: #{tpu_custom_call.1} parent=1 // pred_check
      _
    $region55: #{tpu_custom_call.1} parent=1 // pred_check_branch
      %52 = sbr.rel (0) target = $region57
    $region56: #{tpu_custom_call.1} parent=1 // pred_region
      _
    $region57: #{tpu_custom_call.1} parent=1 // pred_fallthru
      _
    // Predicated region
    $region58: #{tpu_custom_call.1} parent=1 // pred_check
      _
    $region59: #{tpu_custom_call.1} parent=1 // pred_check_branch
      %54 = sbr.rel (0) target = $region61
    $region60: #{tpu_custom_call.1} parent=1 // pred_region
      _
    $region61: #{tpu_custom_call.1} parent=1 // pred_fallthru
      _
    %v55 = vld [vmem:[%s0] sm:$0xff]
    %v56 = vld [vmem:[%s1] sm:$0xff]
    %v57 = vld [vmem:[%s2] sm:$0xff]
    %v58 = vld [vmem:[%s3] sm:$0xff]
    %v59 = vld [vmem:[%s3 + $0x8] sm:$0xff]
    %v60 = vld [vmem:[%s3 + $0x10] sm:$0xff]
    %v61 = vld [vmem:[%s3 + $0x18] sm:$0xff]
    %v62 = vld [vmem:[%s4] sm:$0x1]
    %v64 = vlaneseq
    %v65 = vshrl.u32 %v64, 7
    %v66 = vsub.s32 0, %v65
    %v67 = vrot.slane %v62, %v66
    %vm69 = vcmask 261120
    %v71 = vsel %vm69, %v55, 0
    %73 = vmatprep.subr.mxu0 0.0
    %74 = vmatpush1.msra.mxu0 %v58
    %75 = vmatprep.subr.mxu0 0.0
    %76 = vmatpush1.msra.mxu0 %v59
    %77 = vmatprep.subr.mxu0 0.0
    %78 = vmatpush1.msra.mxu0 %v60
    %79 = vmatprep.subr.mxu0 0.0
    %80 = vmatpush1.msra.mxu0 %v61
    %81 = vmatprep.subr.mxu0 0.0
    %82 = vmatpush1.msra.mxu0 0.0
    %83 = vmatprep.subr.mxu0 0.0
    %84 = vmatpush1.msra.mxu0 0.0
    %85 = vmatprep.subr.mxu0 0.0
    %86 = vmatpush1.msra.mxu0 0.0
    %87 = vmatprep.subr.mxu0 0.0
    %88 = vmatpush1.msra.mxu0 0.0
    %89 = vmatprep.subr.mxu0 0.0
    %90 = vmatpush1.msra.mxu0 0.0
    %91 = vmatprep.subr.mxu0 0.0
    %92 = vmatpush1.msra.mxu0 0.0
    %93 = vmatprep.subr.mxu0 0.0
    %94 = vmatpush1.msra.mxu0 0.0
    %95 = vmatprep.subr.mxu0 0.0
    %96 = vmatpush1.msra.mxu0 0.0
    %97 = vmatprep.subr.mxu0 0.0
    %98 = vmatpush1.msra.mxu0 0.0
    %99 = vmatprep.subr.mxu0 0.0
    %100 = vmatpush1.msra.mxu0 0.0
    %101 = vmatprep.subr.mxu0 0.0
    %102 = vmatpush1.msra.mxu0 0.0
    %103 = vmatprep.subr.mxu0 0.0
    %104 = vmatpush1.msra.mxu0 0.0
    %105 = vmatprep.subr.mxu0 0.0
    %106 = vmatpush1.msra.mxu0 0.0
    %107 = vmatprep.subr.mxu0 0.0
    %108 = vmatpush1.msra.mxu0 0.0
    %109 = vmatprep.subr.mxu0 0.0
    %110 = vmatpush1.msra.mxu0 0.0
    %111 = vmatprep.subr.mxu0 0.0
    %112 = vmatpush1.msra.mxu0 0.0
    %113 = vmatprep.subr.mxu0 0.0
    %114 = vmatpush1.msra.mxu0 0.0
    %115 = vmatprep.subr.mxu0 0.0
    %116 = vmatpush1.msra.mxu0 0.0
    %117 = vmatprep.subr.mxu0 0.0
    %118 = vmatpush1.msra.mxu0 0.0
    %119 = vmatprep.subr.mxu0 0.0
    %120 = vmatpush1.msra.mxu0 0.0
    %121 = vmatprep.subr.mxu0 0.0
    %122 = vmatpush1.msra.mxu0 0.0
    %123 = vmatprep.subr.mxu0 0.0
    %124 = vmatpush1.msra.mxu0 0.0
    %125 = vmatprep.subr.mxu0 0.0
    %126 = vmatpush1.msra.mxu0 0.0
    %127 = vmatprep.subr.mxu0 0.0
    %128 = vmatpush1.msra.mxu0 0.0
    %129 = vmatprep.subr.mxu0 0.0
    %130 = vmatpush1.msra.mxu0 0.0
    %131 = vmatprep.subr.mxu0 0.0
    %132 = vmatpush1.msra.mxu0 0.0
    %133 = vmatprep.subr.mxu0 0.0
    %134 = vmatpush1.msra.mxu0 0.0
    %135 = vmatprep.subr.mxu0 0.0
    %136 = vmatpush1.msra.mxu0 0.0
    %137 = vmatprep.mubr.f32.mxu0 0.0
    %138 = vmatmul.mubr.f32.gmra.mrb[0].mxu0 %v71
    %v139 = vpop.f32.mrb[0].mxu0
    %v140 = vadd.f32 %v67, %v139
    %v141 = vpop.f32.mrb[0].mxu0
    %142 = vdwg.mxu0
    %v143 = vmax.f32 %v140, 0.0
    %v144 = vld [vmem:[%s5] sm:$0xff]
    %v145 = vld [vmem:[%s5 + $0x8] sm:$0xff]
    %v146 = vld [vmem:[%s5 + $0x10] sm:$0xff]
    %v147 = vld [vmem:[%s5 + $0x18] sm:$0xff]
    %v148 = vld [vmem:[%s6] sm:$0x1]
    %v150 = vlaneseq
    %v151 = vshrl.u32 %v150, 7
    %v152 = vsub.s32 0, %v151
    %v153 = vrot.slane %v148, %v152
    %v156 = vsel %vm69, %v143, 0
    %158 = vmatprep.subr.mxu0 0.0
    %159 = vmatpush1.msra.mxu0 %v144
    %160 = vmatprep.subr.mxu0 0.0
    %161 = vmatpush1.msra.mxu0 %v145
    %162 = vmatprep.subr.mxu0 0.0
    %163 = vmatpush1.msra.mxu0 %v146
    %164 = vmatprep.subr.mxu0 0.0
    %165 = vmatpush1.msra.mxu0 %v147
    %166 = vmatprep.subr.mxu0 0.0
    %167 = vmatpush1.msra.mxu0 0.0
    %168 = vmatprep.subr.mxu0 0.0
    %169 = vmatpush1.msra.mxu0 0.0
    %170 = vmatprep.subr.mxu0 0.0
    %171 = vmatpush1.msra.mxu0 0.0
    %172 = vmatprep.subr.mxu0 0.0
    %173 = vmatpush1.msra.mxu0 0.0
    %174 = vmatprep.subr.mxu0 0.0
    %175 = vmatpush1.msra.mxu0 0.0
    %176 = vmatprep.subr.mxu0 0.0
    %177 = vmatpush1.msra.mxu0 0.0
    %178 = vmatprep.subr.mxu0 0.0
    %179 = vmatpush1.msra.mxu0 0.0
    %180 = vmatprep.subr.mxu0 0.0
    %181 = vmatpush1.msra.mxu0 0.0
    %182 = vmatprep.subr.mxu0 0.0
    %183 = vmatpush1.msra.mxu0 0.0
    %184 = vmatprep.subr.mxu0 0.0
    %185 = vmatpush1.msra.mxu0 0.0
    %186 = vmatprep.subr.mxu0 0.0
    %187 = vmatpush1.msra.mxu0 0.0
    %188 = vmatprep.subr.mxu0 0.0
    %189 = vmatpush1.msra.mxu0 0.0
    %190 = vmatprep.subr.mxu0 0.0
    %191 = vmatpush1.msra.mxu0 0.0
    %192 = vmatprep.subr.mxu0 0.0
    %193 = vmatpush1.msra.mxu0 0.0
    %194 = vmatprep.subr.mxu0 0.0
    %195 = vmatpush1.msra.mxu0 0.0
    %196 = vmatprep.subr.mxu0 0.0
    %197 = vmatpush1.msra.mxu0 0.0
    %198 = vmatprep.subr.mxu0 0.0
    %199 = vmatpush1.msra.mxu0 0.0
    %200 = vmatprep.subr.mxu0 0.0
    %201 = vmatpush1.msra.mxu0 0.0
    %202 = vmatprep.subr.mxu0 0.0
    %203 = vmatpush1.msra.mxu0 0.0
    %204 = vmatprep.subr.mxu0 0.0
    %205 = vmatpush1.msra.mxu0 0.0
    %206 = vmatprep.subr.mxu0 0.0
    %207 = vmatpush1.msra.mxu0 0.0
    %208 = vmatprep.subr.mxu0 0.0
    %209 = vmatpush1.msra.mxu0 0.0
    %210 = vmatprep.subr.mxu0 0.0
    %211 = vmatpush1.msra.mxu0 0.0
    %212 = vmatprep.subr.mxu0 0.0
    %213 = vmatpush1.msra.mxu0 0.0
    %214 = vmatprep.subr.mxu0 0.0
    %215 = vmatpush1.msra.mxu0 0.0
    %216 = vmatprep.subr.mxu0 0.0
    %217 = vmatpush1.msra.mxu0 0.0
    %218 = vmatprep.subr.mxu0 0.0
    %219 = vmatpush1.msra.mxu0 0.0
    %220 = vmatprep.subr.mxu0 0.0
    %221 = vmatpush1.msra.mxu0 0.0
    %222 = vmatprep.mubr.f32.mxu0 0.0
    %223 = vmatmul.mubr.f32.gmra.mrb[0].mxu0 %v156
    %v224 = vpop.f32.mrb[0].mxu0
    %v225 = vadd.f32 %v153, %v224
    %v226 = vpop.f32.mrb[0].mxu0
    %227 = vdwg.mxu0
    %v228 = vld [vmem:[%s7] sm:$0xff]
    %v229 = vld [vmem:[%s7 + $0x8] sm:$0xff]
    %v230 = vld [vmem:[%s7 + $0x10] sm:$0xff]
    %v231 = vld [vmem:[%s7 + $0x18] sm:$0xff]
    %v232 = vld [vmem:[%s8] sm:$0x1]
    %v234 = vlaneseq
    %v235 = vshrl.u32 %v234, 7
    %v236 = vsub.s32 0, %v235
    %v237 = vrot.slane %v232, %v236
    %239 = vmatprep.subr.mxu0 0.0
    %240 = vmatpush1.msra.mxu0 %v228
    %241 = vmatprep.subr.mxu0 0.0
    %242 = vmatpush1.msra.mxu0 %v229
    %243 = vmatprep.subr.mxu0 0.0
    %244 = vmatpush1.msra.mxu0 %v230
    %245 = vmatprep.subr.mxu0 0.0
    %246 = vmatpush1.msra.mxu0 %v231
    %247 = vmatprep.subr.mxu0 0.0
    %248 = vmatpush1.msra.mxu0 0.0
    %249 = vmatprep.subr.mxu0 0.0
    %250 = vmatpush1.msra.mxu0 0.0
    %251 = vmatprep.subr.mxu0 0.0
    %252 = vmatpush1.msra.mxu0 0.0
    %253 = vmatprep.subr.mxu0 0.0
    %254 = vmatpush1.msra.mxu0 0.0
    %255 = vmatprep.subr.mxu0 0.0
    %256 = vmatpush1.msra.mxu0 0.0
    %257 = vmatprep.subr.mxu0 0.0
    %258 = vmatpush1.msra.mxu0 0.0
    %259 = vmatprep.subr.mxu0 0.0
    %260 = vmatpush1.msra.mxu0 0.0
    %261 = vmatprep.subr.mxu0 0.0
    %262 = vmatpush1.msra.mxu0 0.0
    %263 = vmatprep.subr.mxu0 0.0
    %264 = vmatpush1.msra.mxu0 0.0
    %265 = vmatprep.subr.mxu0 0.0
    %266 = vmatpush1.msra.mxu0 0.0
    %267 = vmatprep.subr.mxu0 0.0
    %268 = vmatpush1.msra.mxu0 0.0
    %269 = vmatprep.subr.mxu0 0.0
    %270 = vmatpush1.msra.mxu0 0.0
    %271 = vmatprep.subr.mxu0 0.0
    %272 = vmatpush1.msra.mxu0 0.0
    %273 = vmatprep.subr.mxu0 0.0
    %274 = vmatpush1.msra.mxu0 0.0
    %275 = vmatprep.subr.mxu0 0.0
    %276 = vmatpush1.msra.mxu0 0.0
    %277 = vmatprep.subr.mxu0 0.0
    %278 = vmatpush1.msra.mxu0 0.0
    %279 = vmatprep.subr.mxu0 0.0
    %280 = vmatpush1.msra.mxu0 0.0
    %281 = vmatprep.subr.mxu0 0.0
    %282 = vmatpush1.msra.mxu0 0.0
    %283 = vmatprep.subr.mxu0 0.0
    %284 = vmatpush1.msra.mxu0 0.0
    %285 = vmatprep.subr.mxu0 0.0
    %286 = vmatpush1.msra.mxu0 0.0
    %287 = vmatprep.subr.mxu0 0.0
    %288 = vmatpush1.msra.mxu0 0.0
    %289 = vmatprep.subr.mxu0 0.0
    %290 = vmatpush1.msra.mxu0 0.0
    %291 = vmatprep.subr.mxu0 0.0
    %292 = vmatpush1.msra.mxu0 0.0
    %293 = vmatprep.subr.mxu0 0.0
    %294 = vmatpush1.msra.mxu0 0.0
    %295 = vmatprep.subr.mxu0 0.0
    %296 = vmatpush1.msra.mxu0 0.0
    %297 = vmatprep.subr.mxu0 0.0
    %298 = vmatpush1.msra.mxu0 0.0
    %299 = vmatprep.subr.mxu0 0.0
    %300 = vmatpush1.msra.mxu0 0.0
    %301 = vmatprep.subr.mxu0 0.0
    %302 = vmatpush1.msra.mxu0 0.0
    %303 = vmatprep.mubr.f32.mxu0 0.0
    %304 = vmatmul.mubr.f32.gmra.mrb[0].mxu0 %v156
    %v305 = vpop.f32.mrb[0].mxu0
    %v306 = vadd.f32 %v237, %v305
    %v307 = vpop.f32.mrb[0].mxu0
    %308 = vdwg.mxu0
    %v309 = vmax.f32 %v306, 0.0
    %vm310 = vcmp.ne.f32.partialorder %v306, %v306
    %v311 = vadd.f32 %v306, 0.0
    %v312 = vand.u32 2147483647, %v306
    %v313 = vsub.f32 0.0, %v312
    %v314 = vmul.f32 %v313, 1.442695
    %v315 = vpow.pop %v314
    %v316 = vadd.f32 %v315, 1.0
    %v317 = vlog2.pop %v316
    %v318 = vmul.f32 %v317, 0.6931472
    %v319 = vmul.f32 -0.5, %v315
    %v320 = vadd.f32 %v319, 1.0
    %v321 = vmul.f32 %v320, %v315
    %v322 = vand.u32 2147483647, %v315
    %vm323 = vcmp.lt.f32.partialorder %v322, 0.0004427343
    %v324 = vsel %vm323, %v321, %v318
    %v325 = vadd.f32 %v309, %v324
    %v326 = vsel %vm310, %v311, %v325
    %v327 = vadd.f32 %v326, 1e-06
    %v328 = vmul.f32 %v327, %v56
    %v329 = vadd.f32 %v225, %v328
    %vm330 = vcmask 130048
    %331 = vst.msk [vmem:[#allocation2] sm:$0xff] %vm330, %v329
    %v332 = vmul.f32 %v56, -0.5
    %v333 = vmul.f32 %v332, %v56
    %v334 = vlog2.pop %v327
    %v335 = vmul.f32 %v334, 0.6931472
    %v336 = vsub.f32 %v333, %v335
    %v337 = vsub.f32 %v336, 0.9189385
    %v338 = vsel %vm330, %v337, 0.0
    %339 = vadd.xlane.f32.xlu0 %v338
    %v340 = vpop.xlane.xlu0 %339
    %v341 = vld [vmem:[%s9] sm:$0xff]
    %v342 = vld [vmem:[%s9 + $0x8] sm:$0xff]
    %v343 = vld [vmem:[%s10] sm:$0x1]
    %v345 = vlaneseq
    %v346 = vshrl.u32 %v345, 7
    %v347 = vsub.s32 0, %v346
    %v348 = vrot.slane %v343, %v347
    %v351 = vsel %vm330, %v329, 0
    %353 = vmatprep.subr.mxu0 0.0
    %354 = vmatpush1.msra.mxu0 %v341
    %355 = vmatprep.subr.mxu0 0.0
    %356 = vmatpush1.msra.mxu0 %v342
    %357 = vmatprep.subr.mxu0 0.0
    %358 = vmatpush1.msra.mxu0 0.0
    %359 = vmatprep.subr.mxu0 0.0
    %360 = vmatpush1.msra.mxu0 0.0
    %361 = vmatprep.subr.mxu0 0.0
    %362 = vmatpush1.msra.mxu0 0.0
    %363 = vmatprep.subr.mxu0 0.0
    %364 = vmatpush1.msra.mxu0 0.0
    %365 = vmatprep.subr.mxu0 0.0
    %366 = vmatpush1.msra.mxu0 0.0
    %367 = vmatprep.subr.mxu0 0.0
    %368 = vmatpush1.msra.mxu0 0.0
    %369 = vmatprep.subr.mxu0 0.0
    %370 = vmatpush1.msra.mxu0 0.0
    %371 = vmatprep.subr.mxu0 0.0
    %372 = vmatpush1.msra.mxu0 0.0
    %373 = vmatprep.subr.mxu0 0.0
    %374 = vmatpush1.msra.mxu0 0.0
    %375 = vmatprep.subr.mxu0 0.0
    %376 = vmatpush1.msra.mxu0 0.0
    %377 = vmatprep.subr.mxu0 0.0
    %378 = vmatpush1.msra.mxu0 0.0
    %379 = vmatprep.subr.mxu0 0.0
    %380 = vmatpush1.msra.mxu0 0.0
    %381 = vmatprep.subr.mxu0 0.0
    %382 = vmatpush1.msra.mxu0 0.0
    %383 = vmatprep.subr.mxu0 0.0
    %384 = vmatpush1.msra.mxu0 0.0
    %385 = vmatprep.subr.mxu0 0.0
    %386 = vmatpush1.msra.mxu0 0.0
    %387 = vmatprep.subr.mxu0 0.0
    %388 = vmatpush1.msra.mxu0 0.0
    %389 = vmatprep.subr.mxu0 0.0
    %390 = vmatpush1.msra.mxu0 0.0
    %391 = vmatprep.subr.mxu0 0.0
    %392 = vmatpush1.msra.mxu0 0.0
    %393 = vmatprep.subr.mxu0 0.0
    %394 = vmatpush1.msra.mxu0 0.0
    %395 = vmatprep.subr.mxu0 0.0
    %396 = vmatpush1.msra.mxu0 0.0
    %397 = vmatprep.subr.mxu0 0.0
    %398 = vmatpush1.msra.mxu0 0.0
    %399 = vmatprep.subr.mxu0 0.0
    %400 = vmatpush1.msra.mxu0 0.0
    %401 = vmatprep.subr.mxu0 0.0
    %402 = vmatpush1.msra.mxu0 0.0
    %403 = vmatprep.subr.mxu0 0.0
    %404 = vmatpush1.msra.mxu0 0.0
    %405 = vmatprep.subr.mxu0 0.0
    %406 = vmatpush1.msra.mxu0 0.0
    %407 = vmatprep.subr.mxu0 0.0
    %408 = vmatpush1.msra.mxu0 0.0
    %409 = vmatprep.subr.mxu0 0.0
    %410 = vmatpush1.msra.mxu0 0.0
    %411 = vmatprep.subr.mxu0 0.0
    %412 = vmatpush1.msra.mxu0 0.0
    %413 = vmatprep.subr.mxu0 0.0
    %414 = vmatpush1.msra.mxu0 0.0
    %415 = vmatprep.subr.mxu0 0.0
    %416 = vmatpush1.msra.mxu0 0.0
    %417 = vmatprep.mubr.f32.mxu0 0.0
    %418 = vmatmul.mubr.f32.gmra.mrb[0].mxu0 %v351
    %v419 = vpop.f32.mrb[0].mxu0
    %v420 = vadd.f32 %v348, %v419
    %v421 = vpop.f32.mrb[0].mxu0
    %422 = vdwg.mxu0
    %v423 = vmax.f32 %v420, 0.0
    %v424 = vld [vmem:[%s11] sm:$0xff]
    %v425 = vld [vmem:[%s11 + $0x8] sm:$0xff]
    %v426 = vld [vmem:[%s11 + $0x10] sm:$0xff]
    %v427 = vld [vmem:[%s11 + $0x18] sm:$0xff]
    %v428 = vld [vmem:[%s12] sm:$0x1]
    %v430 = vlaneseq
    %v431 = vshrl.u32 %v430, 7
    %v432 = vsub.s32 0, %v431
    %v433 = vrot.slane %v428, %v432
    %v436 = vsel %vm69, %v423, 0
    %438 = vmatprep.subr.mxu0 0.0
    %439 = vmatpush1.msra.mxu0 %v424
    %440 = vmatprep.subr.mxu0 0.0
    %441 = vmatpush1.msra.mxu0 %v425
    %442 = vmatprep.subr.mxu0 0.0
    %443 = vmatpush1.msra.mxu0 %v426
    %444 = vmatprep.subr.mxu0 0.0
    %445 = vmatpush1.msra.mxu0 %v427
    %446 = vmatprep.subr.mxu0 0.0
    %447 = vmatpush1.msra.mxu0 0.0
    %448 = vmatprep.subr.mxu0 0.0
    %449 = vmatpush1.msra.mxu0 0.0
    %450 = vmatprep.subr.mxu0 0.0
    %451 = vmatpush1.msra.mxu0 0.0
    %452 = vmatprep.subr.mxu0 0.0
    %453 = vmatpush1.msra.mxu0 0.0
    %454 = vmatprep.subr.mxu0 0.0
    %455 = vmatpush1.msra.mxu0 0.0
    %456 = vmatprep.subr.mxu0 0.0
    %457 = vmatpush1.msra.mxu0 0.0
    %458 = vmatprep.subr.mxu0 0.0
    %459 = vmatpush1.msra.mxu0 0.0
    %460 = vmatprep.subr.mxu0 0.0
    %461 = vmatpush1.msra.mxu0 0.0
    %462 = vmatprep.subr.mxu0 0.0
    %463 = vmatpush1.msra.mxu0 0.0
    %464 = vmatprep.subr.mxu0 0.0
    %465 = vmatpush1.msra.mxu0 0.0
    %466 = vmatprep.subr.mxu0 0.0
    %467 = vmatpush1.msra.mxu0 0.0
    %468 = vmatprep.subr.mxu0 0.0
    %469 = vmatpush1.msra.mxu0 0.0
    %470 = vmatprep.subr.mxu0 0.0
    %471 = vmatpush1.msra.mxu0 0.0
    %472 = vmatprep.subr.mxu0 0.0
    %473 = vmatpush1.msra.mxu0 0.0
    %474 = vmatprep.subr.mxu0 0.0
    %475 = vmatpush1.msra.mxu0 0.0
    %476 = vmatprep.subr.mxu0 0.0
    %477 = vmatpush1.msra.mxu0 0.0
    %478 = vmatprep.subr.mxu0 0.0
    %479 = vmatpush1.msra.mxu0 0.0
    %480 = vmatprep.subr.mxu0 0.0
    %481 = vmatpush1.msra.mxu0 0.0
    %482 = vmatprep.subr.mxu0 0.0
    %483 = vmatpush1.msra.mxu0 0.0
    %484 = vmatprep.subr.mxu0 0.0
    %485 = vmatpush1.msra.mxu0 0.0
    %486 = vmatprep.subr.mxu0 0.0
    %487 = vmatpush1.msra.mxu0 0.0
    %488 = vmatprep.subr.mxu0 0.0
    %489 = vmatpush1.msra.mxu0 0.0
    %490 = vmatprep.subr.mxu0 0.0
    %491 = vmatpush1.msra.mxu0 0.0
    %492 = vmatprep.subr.mxu0 0.0
    %493 = vmatpush1.msra.mxu0 0.0
    %494 = vmatprep.subr.mxu0 0.0
    %495 = vmatpush1.msra.mxu0 0.0
    %496 = vmatprep.subr.mxu0 0.0
    %497 = vmatpush1.msra.mxu0 0.0
    %498 = vmatprep.subr.mxu0 0.0
    %499 = vmatpush1.msra.mxu0 0.0
    %500 = vmatprep.subr.mxu0 0.0
    %501 = vmatpush1.msra.mxu0 0.0
    %502 = vmatprep.mubr.f32.mxu0 0.0
    %503 = vmatmul.mubr.f32.gmra.mrb[0].mxu0 %v436
    %v504 = vpop.f32.mrb[0].mxu0
    %v505 = vadd.f32 %v433, %v504
    %v506 = vpop.f32.mrb[0].mxu0
    %507 = vdwg.mxu0
    %v508 = vld [vmem:[%s13] sm:$0xff]
    %v509 = vld [vmem:[%s13 + $0x8] sm:$0xff]
    %v510 = vld [vmem:[%s13 + $0x10] sm:$0xff]
    %v511 = vld [vmem:[%s13 + $0x18] sm:$0xff]
    %v512 = vld [vmem:[%s14] sm:$0x1]
    %v514 = vlaneseq
    %v515 = vshrl.u32 %v514, 7
    %v516 = vsub.s32 0, %v515
    %v517 = vrot.slane %v512, %v516
    %519 = vmatprep.subr.mxu0 0.0
    %520 = vmatpush1.msra.mxu0 %v508
    %521 = vmatprep.subr.mxu0 0.0
    %522 = vmatpush1.msra.mxu0 %v509
    %523 = vmatprep.subr.mxu0 0.0
    %524 = vmatpush1.msra.mxu0 %v510
    %525 = vmatprep.subr.mxu0 0.0
    %526 = vmatpush1.msra.mxu0 %v511
    %527 = vmatprep.subr.mxu0 0.0
    %528 = vmatpush1.msra.mxu0 0.0
    %529 = vmatprep.subr.mxu0 0.0
    %530 = vmatpush1.msra.mxu0 0.0
    %531 = vmatprep.subr.mxu0 0.0
    %532 = vmatpush1.msra.mxu0 0.0
    %533 = vmatprep.subr.mxu0 0.0
    %534 = vmatpush1.msra.mxu0 0.0
    %535 = vmatprep.subr.mxu0 0.0
    %536 = vmatpush1.msra.mxu0 0.0
    %537 = vmatprep.subr.mxu0 0.0
    %538 = vmatpush1.msra.mxu0 0.0
    %539 = vmatprep.subr.mxu0 0.0
    %540 = vmatpush1.msra.mxu0 0.0
    %541 = vmatprep.subr.mxu0 0.0
    %542 = vmatpush1.msra.mxu0 0.0
    %543 = vmatprep.subr.mxu0 0.0
    %544 = vmatpush1.msra.mxu0 0.0
    %545 = vmatprep.subr.mxu0 0.0
    %546 = vmatpush1.msra.mxu0 0.0
    %547 = vmatprep.subr.mxu0 0.0
    %548 = vmatpush1.msra.mxu0 0.0
    %549 = vmatprep.subr.mxu0 0.0
    %550 = vmatpush1.msra.mxu0 0.0
    %551 = vmatprep.subr.mxu0 0.0
    %552 = vmatpush1.msra.mxu0 0.0
    %553 = vmatprep.subr.mxu0 0.0
    %554 = vmatpush1.msra.mxu0 0.0
    %555 = vmatprep.subr.mxu0 0.0
    %556 = vmatpush1.msra.mxu0 0.0
    %557 = vmatprep.subr.mxu0 0.0
    %558 = vmatpush1.msra.mxu0 0.0
    %559 = vmatprep.subr.mxu0 0.0
    %560 = vmatpush1.msra.mxu0 0.0
    %561 = vmatprep.subr.mxu0 0.0
    %562 = vmatpush1.msra.mxu0 0.0
    %563 = vmatprep.subr.mxu0 0.0
    %564 = vmatpush1.msra.mxu0 0.0
    %565 = vmatprep.subr.mxu0 0.0
    %566 = vmatpush1.msra.mxu0 0.0
    %567 = vmatprep.subr.mxu0 0.0
    %568 = vmatpush1.msra.mxu0 0.0
    %569 = vmatprep.subr.mxu0 0.0
    %570 = vmatpush1.msra.mxu0 0.0
    %571 = vmatprep.subr.mxu0 0.0
    %572 = vmatpush1.msra.mxu0 0.0
    %573 = vmatprep.subr.mxu0 0.0
    %574 = vmatpush1.msra.mxu0 0.0
    %575 = vmatprep.subr.mxu0 0.0
    %576 = vmatpush1.msra.mxu0 0.0
    %577 = vmatprep.subr.mxu0 0.0
    %578 = vmatpush1.msra.mxu0 0.0
    %579 = vmatprep.subr.mxu0 0.0
    %580 = vmatpush1.msra.mxu0 0.0
    %581 = vmatprep.subr.mxu0 0.0
    %582 = vmatpush1.msra.mxu0 0.0
    %583 = vmatprep.mubr.f32.mxu0 0.0
    %584 = vmatmul.mubr.f32.gmra.mrb[0].mxu0 %v436
    %v585 = vpop.f32.mrb[0].mxu0
    %v586 = vadd.f32 %v517, %v585
    %v587 = vpop.f32.mrb[0].mxu0
    %588 = vdwg.mxu0
    %v589 = vmax.f32 %v586, 0.0
    %vm590 = vcmp.ne.f32.partialorder %v586, %v586
    %v591 = vadd.f32 %v586, 0.0
    %v592 = vand.u32 2147483647, %v586
    %v593 = vsub.f32 0.0, %v592
    %v594 = vmul.f32 %v593, 1.442695
    %v595 = vpow.pop %v594
    %v596 = vadd.f32 %v595, 1.0
    %v597 = vlog2.pop %v596
    %v598 = vmul.f32 %v597, 0.6931472
    %v599 = vmul.f32 -0.5, %v595
    %v600 = vadd.f32 %v599, 1.0
    %v601 = vmul.f32 %v600, %v595
    %v602 = vand.u32 2147483647, %v595
    %vm603 = vcmp.lt.f32.partialorder %v602, 0.0004427343
    %v604 = vsel %vm603, %v601, %v598
    %v605 = vadd.f32 %v589, %v604
    %v606 = vsel %vm590, %v591, %v605
    %v607 = vadd.f32 %v606, 1e-06
    %v608 = vmul.f32 %v607, %v57
    %v609 = vadd.f32 %v505, %v608
    %610 = vst.msk [vmem:[#allocation4] sm:$0xff] %vm330, %v609
    %v611 = vmul.f32 %v57, -0.5
    %v612 = vmul.f32 %v611, %v57
    %v613 = vlog2.pop %v607
    %v614 = vmul.f32 %v613, 0.6931472
    %v615 = vsub.f32 %v612, %v614
    %v616 = vsub.f32 %v615, 0.9189385
    %v617 = vsel %vm330, %v616, 0.0
    %618 = vadd.xlane.f32.xlu0 %v617
    %v619 = vpop.xlane.xlu0 %618
    %v620 = vlaneseq
    %v621 = vand.u32 %v620, 127
    %vm622 = vcmp.eq.s32.totalorder %v621, 0
    %vm623 = vcmp.eq.s32.totalorder %v621, 1
    %v624 = vsel %vm623, %v619, 0.0
    %v625 = vsel %vm622, %v340, %v624
    %626 = vst [vmem:[#allocation6] sm:$0xff] %v625
    // Predicated region
    $region62: #{tpu_custom_call.1} parent=1 // pred_check
      _
    $region63: #{tpu_custom_call.1} parent=1 // pred_check_branch
      %628 = sbr.rel (0) target = $region65
    $region64: #{tpu_custom_call.1} parent=1 // pred_region
      %s630 = ssub.s32 128, 128
      %631 = vsyncadd [#allocation3], %s630
      %s633 = sshll.u32 [#allocation2], 4
      %s634 = int_to_ptr.vmem [resolvable:$true] %s633
      %636 = dma.vmem_to_hbm [thread:$0]  %s634, 128, %s15, [#allocation3]
    $region65: #{tpu_custom_call.1} parent=1 // pred_fallthru
      _
    // Predicated region
    $region66: #{tpu_custom_call.1} parent=1 // pred_check
      _
    $region67: #{tpu_custom_call.1} parent=1 // pred_check_branch
      %638 = sbr.rel (0) target = $region69
    $region68: #{tpu_custom_call.1} parent=1 // pred_region
      %s640 = ssub.s32 128, 128
      %641 = vsyncadd [#allocation5], %s640
      %s643 = sshll.u32 [#allocation4], 4
      %s644 = int_to_ptr.vmem [resolvable:$true] %s643
      %646 = dma.vmem_to_hbm [thread:$0]  %s644, 128, %s16, [#allocation5]
    $region69: #{tpu_custom_call.1} parent=1 // pred_fallthru
      _
    // Predicated region
    $region70: #{tpu_custom_call.1} parent=1 // pred_check
      _
    $region71: #{tpu_custom_call.1} parent=1 // pred_check_branch
      %648 = sbr.rel (0) target = $region73
    $region72: #{tpu_custom_call.1} parent=1 // pred_region
      %s650 = ssub.s32 128, 128
      %651 = vsyncadd [#allocation5], %s650
      %s653 = sshll.u32 [#allocation6], 4
      %s654 = int_to_ptr.vmem [resolvable:$true] %s653
      %656 = dma.vmem_to_hbm [thread:$0]  %s654, 128, %s17, [#allocation5]
    $region73: #{tpu_custom_call.1} parent=1 // pred_fallthru
      _
    // Predicated region
    $region74: #{tpu_custom_call.1} parent=1 // pred_check
      _
    $region75: #{tpu_custom_call.1} parent=1 // pred_check_branch
      %658 = sbr.rel (0) target = $region77
    $region76: #{tpu_custom_call.1} parent=1 // pred_region
      %659 = dma.done [#allocation3], 128
    $region77: #{tpu_custom_call.1} parent=1 // pred_fallthru
      _
    // Predicated region
    $region78: #{tpu_custom_call.1} parent=1 // pred_check
      _
    $region79: #{tpu_custom_call.1} parent=1 // pred_check_branch
      %661 = sbr.rel (0) target = $region81
    $region80: #{tpu_custom_call.1} parent=1 // pred_region
      %662 = dma.done [#allocation5], 128
    $region81: #{tpu_custom_call.1} parent=1 // pred_fallthru
      _
    // Predicated region
    $region82: #{tpu_custom_call.1} parent=1 // pred_check
      _
    $region83: #{tpu_custom_call.1} parent=1 // pred_check_branch
      %664 = sbr.rel (0) target = $region85
    $region84: #{tpu_custom_call.1} parent=1 // pred_region
      %665 = dma.done [#allocation5], 128
    $region85: #{tpu_custom_call.1} parent=1 // pred_fallthru
      _
    %666 = vsyncpa [#allocation3], 1
    %667 = vsyncpa [#allocation5], 1

</llo_original>
